<compile_context>
chip_gen: v7x
topology: tpu7x:2x2x1
jax: 0.10.0
libtpu: 0.0.40
codegen_flags: <defaults>
</compile_context>

<pallas_src>
import jax
import jax.numpy as jnp
from jax.experimental import pallas as pl
from jax.experimental.pallas import tpu as pltpu


# ----------------------------------------------------------------------------- kernel


def _make_pixelnorm_kernel(inv_c, has_bias, negative_slope):
    """Kernel over one (1, C, T_HW) block: [bias] -> pixelnorm -> [leaky relu]."""

    def kernel(*refs):
        if has_bias:
            x_ref, b_ref, o_ref = refs
        else:
            x_ref, o_ref = refs

        x = x_ref[...]                                   # (1, C, T)
        if has_bias:
            x = x + b_ref[...]                           # (1, C, 1) lane-broadcast add

        xf = x.astype(jnp.float32)
        ssq = jnp.sum(xf * xf, axis=1, keepdims=True)    # (1, 1, T) sublane reduce (XLU)
        inv = jax.lax.rsqrt(ssq * inv_c + 1e-8)          # EUP: one rsqrt per HW location

        if x.dtype == jnp.float32:
            y = xf * inv                                 # VPU sublane-broadcast multiply
        else:
            # bf16 path (v6e/v7x): keep the scaled output in bf16, halving temp traffic.
            y = x * inv.astype(x.dtype)

        if negative_slope is not None:
            y = jnp.where(y >= 0, y, y * negative_slope)

        o_ref[...] = y.astype(o_ref.dtype)

    return kernel


# ------------------------------------------------------------------------- tile sizing


def _vmem_config():
    """Generation-aware (block budget, scoped vmem limit) in bytes."""
    try:
        cap = pltpu.get_tpu_info().vmem_capacity_bytes
    except Exception:
        cap = 64 << 20  # conservative (v7x-sized) fallback
    budget = min(24 << 20, cap // 4)          # v5e/v6e: 24 MiB, v7x: 16 MiB
    limit = min(48 << 20, (cap * 3) // 4)     # explicit scoped-VMEM limit
    return budget, limit


def _choose_hw_tile(hw, c, itemsize, budget_bytes):
    """Largest 128-multiple tile of hw that divides hw and keeps the
    double-buffered (in + out) blocks within the block budget."""
    assert hw % 128 == 0
    per_col_bytes = 4 * c * itemsize          # in + out, double-buffered each
    cap = max(128, (budget_bytes // per_col_bytes) // 128 * 128)
    t = min(hw, cap)
    while hw % t != 0:
        t -= 128
    return t


def _ensure_multi_tile(hw, t, n, min_tiles=2):
    """Shrink the HW tile (to a 128-multiple divisor) so the grid exposes at least
    `min_tiles` blocks — keeps both v7x TensorCores busy even at batch 1."""
    while n * (hw // t) < min_tiles and t > 128:
        nt = t - 128
        while nt >= 128 and hw % nt != 0:
            nt -= 128
        if nt < 128:
            break
        t = nt
    return t


# ----------------------------------------------------------------------------- wrapper


def _pixel_norm_jax(x, bias=None, negative_slope=None):
    """Pure-JAX fallback for shapes where a Pallas launch cannot be lane-dense."""
    xf = x.astype(jnp.float32)
    if bias is not None:
        xf = xf + jnp.asarray(bias, jnp.float32).reshape(1, -1, 1, 1)
    y = xf * jax.lax.rsqrt(jnp.mean(xf * xf, axis=1, keepdims=True) + 1e-8)
    if negative_slope is not None:
        y = jnp.where(y >= 0, y, y * negative_slope)
    return y.astype(x.dtype)


def pixel_norm(x, *, bias=None, negative_slope=None, vmem_budget_bytes=None):
    """x: (N, C, H, W) -> (N, C, H, W).

    out = leaky_relu( (x + bias) / sqrt(mean((x + bias)**2, axis=1) + 1e-8) )
    with bias / leaky_relu optional (defaults reproduce plain PixelNorm).
    """
    N, C, H, W = x.shape
    HW = H * W
    itemsize = jnp.dtype(x.dtype).itemsize

    budget, limit = _vmem_config()
    if vmem_budget_bytes is not None:
        budget = vmem_budget_bytes

    # ---- layout dispatch -----------------------------------------------------------
    if HW % 128 == 0:
        x3 = x.reshape(N, C, HW)
        n_grid, hw_eff = N, HW
        packed = False
    elif (N * HW) % 128 == 0:
        # Tiny spatial stages (4x4 / 8x8): lane-pack batch so the last dim is >= 128.
        # Each lane column is one (n, hw) site; the channel reduce is unchanged.
        x3 = jnp.transpose(x.reshape(N, C, HW), (1, 0, 2)).reshape(1, C, N * HW)
        n_grid, hw_eff = 1, N * HW
        packed = True
    else:
        # Not lane-packable to a 128 multiple: masked stores + launch overhead would
        # dominate, so let XLA handle it.
        return _pixel_norm_jax(x, bias=bias, negative_slope=negative_slope)

    # ---- tiling ----------------------------------------------------------------------
    t_hw = _choose_hw_tile(hw_eff, C, itemsize, budget)
    t_hw = _ensure_multi_tile(hw_eff, t_hw, n_grid)
    grid = (n_grid, hw_eff // t_hw)

    # Explicit scoped-VMEM limit covering blocks (double-buffered in+out) plus the
    # f32 square / upcast temps the compiler materializes.
    needed = 4 * C * t_hw * itemsize + 3 * C * t_hw * 4 + (1 << 20)
    vmem_limit = int(max(limit, needed))

    # ---- kernel / specs ----------------------------------------------------------------
    kernel = _make_pixelnorm_kernel(1.0 / C, bias is not None, negative_slope)

    in_specs = [pl.BlockSpec((1, C, t_hw), lambda i, j: (i, 0, j))]
    inputs = [x3]
    if bias is not None:
        b3 = jnp.asarray(bias, x.dtype).reshape(1, C, 1)
        in_specs.append(pl.BlockSpec((1, C, 1), lambda i, j: (0, 0, 0)))
        inputs.append(b3)

    cost = pl.CostEstimate(
        flops=4 * N * C * HW,                 # bias + square + sum + scale (+relu)
        transcendentals=N * HW,               # one rsqrt per spatial location
        bytes_accessed=2 * N * C * HW * itemsize,
    )

    out = pl.pallas_call(
        kernel,
        out_shape=jax.ShapeDtypeStruct(x3.shape, x.dtype),
        grid_spec=pltpu.PrefetchScalarGridSpec(
            num_scalar_prefetch=0,
            grid=grid,
            in_specs=in_specs,
            out_specs=pl.BlockSpec((1, C, t_hw), lambda i, j: (i, 0, j)),
        ),
        compiler_params=pltpu.CompilerParams(
            dimension_semantics=("parallel", "parallel"),
            vmem_limit_bytes=vmem_limit,
        ),
        cost_estimate=cost,
    )(*inputs)

    if packed:
        out = jnp.transpose(out.reshape(C, N, HW), (1, 0, 2))
    return out.reshape(N, C, H, W)


# --------------------------------------------------------------------------- reference


def pixel_norm_ref(x, bias=None, negative_slope=None):
    xf = x.astype(jnp.float32)
    if bias is not None:
        xf = xf + jnp.asarray(bias, jnp.float32).reshape(1, -1, 1, 1)
    y = xf / jnp.sqrt(jnp.mean(xf ** 2, axis=1, keepdims=True) + 1e-8)
    if negative_slope is not None:
        y = jnp.where(y >= 0, y, y * negative_slope)
    return y.astype(x.dtype)


# --------------------------------------------------------------------------------- main


if __name__ == "__main__":
    key = jax.random.PRNGKey(0)
    k1, k2, k3, k4, kb = jax.random.split(key, 5)

    # 1) Plain PixelNorm, module-sized toy shape (HW = 256, single-shot path).
    x = jax.random.normal(k1, (2, 4, 16, 16), dtype=jnp.float32)
    y = pixel_norm(x)
    jax.block_until_ready(y)
    assert y.shape == x.shape and y.dtype == x.dtype
    assert jnp.allclose(y, pixel_norm_ref(x), atol=1e-5, rtol=1e-5)

    # 2) Fused ConvBlock epilogue: conv-bias prologue + PixelNorm + LeakyReLU(0.1).
    bias = jax.random.normal(kb, (4,), dtype=jnp.float32) * 0.1
    y_f = pixel_norm(x, bias=bias, negative_slope=0.1)
    jax.block_until_ready(y_f)
    assert jnp.allclose(
        y_f, pixel_norm_ref(x, bias=bias, negative_slope=0.1), atol=1e-5, rtol=1e-5
    )

    # 3) Multi-tile HW grid path (tiny budget forces t_hw=128 -> grid=(2, 4)).
    x2 = jax.random.normal(k2, (2, 8, 16, 32), dtype=jnp.float32)
    y2 = pixel_norm(x2, vmem_budget_bytes=16 * 1024)
    jax.block_until_ready(y2)
    assert jnp.allclose(y2, pixel_norm_ref(x2), atol=1e-5, rtol=1e-5)

    # 4) Small-HW (8x8) lane-packed path: batch folded into lanes, still one Pallas pass.
    x3 = jax.random.normal(k3, (4, 8, 8, 8), dtype=jnp.float32)
    y3 = pixel_norm(x3, bias=jax.random.normal(k4, (8,), dtype=jnp.float32) * 0.1,
                    negative_slope=0.1)
    jax.block_until_ready(y3)
    assert jnp.allclose(
        y3,
        pixel_norm_ref(x3, bias=jax.random.normal(k4, (8,), dtype=jnp.float32) * 0.1,
                       negative_slope=0.1),
        atol=1e-5, rtol=1e-5,
    )

    print("KERNEL_OK")
</pallas_src>

<mosaic_0001>
module attributes {stable_mosaic.version = 11 : i64} {
  func.func @kernel(%arg0: i32, %arg1: i32, %arg2: memref<1x4x256xf32, #tpu.memory_space<vmem>>, %arg3: memref<1x4x256xf32, #tpu.memory_space<vmem>>) attributes {dimension_semantics = [#tpu.dimension_semantics<parallel>, #tpu.dimension_semantics<parallel>], iteration_bounds = array<i64: 2, 1>, scalar_prefetch = 0 : i64, scratch_operands = 0 : i64, tpu.core_type = #tpu.core_type<tc>, window_params = [{transform_indices = @transform_0, window_bounds = array<i64: 1, 4, 256>}, {transform_indices = @transform_1, window_bounds = array<i64: 1, 4, 256>}]} {
    %c0 = arith.constant 0 : index
    %c0_0 = arith.constant 0 : index
    %c0_1 = arith.constant 0 : index
    %0 = vector.load %arg2[%c0, %c0_0, %c0_1] : memref<1x4x256xf32, #tpu.memory_space<vmem>>, vector<1x4x256xf32>
    %1 = arith.mulf %0, %0 : vector<1x4x256xf32>
    %cst = arith.constant dense<0.000000e+00> : vector<1x256xf32>
    %2 = vector.multi_reduction <add>, %1, %cst [1] : vector<1x4x256xf32> to vector<1x256xf32>
    %3 = vector.shape_cast %2 : vector<1x256xf32> to vector<1x1x256xf32>
    %cst_2 = arith.constant 2.500000e-01 : f32
    %4 = vector.broadcast %cst_2 : f32 to vector<1x1x256xf32>
    %5 = arith.mulf %3, %4 : vector<1x1x256xf32>
    %cst_3 = arith.constant 9.99999993E-9 : f32
    %6 = vector.broadcast %cst_3 : f32 to vector<1x1x256xf32>
    %7 = arith.addf %5, %6 : vector<1x1x256xf32>
    %8 = math.rsqrt %7 : vector<1x1x256xf32>
    %9 = vector.broadcast %8 : vector<1x1x256xf32> to vector<1x4x256xf32>
    %10 = arith.mulf %0, %9 : vector<1x4x256xf32>
    %c0_4 = arith.constant 0 : index
    %c0_5 = arith.constant 0 : index
    %c0_6 = arith.constant 0 : index
    %11 = vector.load %arg3[%c0_4, %c0_5, %c0_6] : memref<1x4x256xf32, #tpu.memory_space<vmem>>, vector<1x4x256xf32>
    tpu.vector_store %arg3[%c0_4, %c0_5, %c0_6], %10 {strides = array<i32>} : memref<1x4x256xf32, #tpu.memory_space<vmem>>, vector<1x4x256xf32>,
    return
  }
  func.func @transform_0(%arg0: i32, %arg1: i32) -> (i32, i32, i32) {
    %c0_i32 = arith.constant 0 : i32
    %c0_i32_0 = arith.constant 0 : i32
    return %arg0, %c0_i32, %arg1 : i32, i32, i32
  }
  func.func @transform_1(%arg0: i32, %arg1: i32) -> (i32, i32, i32) {
    %c0_i32 = arith.constant 0 : i32
    %c0_i32_0 = arith.constant 0 : i32
    return %arg0, %c0_i32, %arg1 : i32, i32, i32
  }
}

</mosaic_0001>

<llo_original>
// kernel: tpu_custom_call.1
$region0: #{tpu_custom_call.1}
  #allocation0 [shape = 'u32[]', space=smem, size = 0x4, offset = 0x4, fixed_abs, tag = 'smem constant byte address 0x4 - core index']
  #allocation1 [shape = 'u32[144,128]{1,0:T(1,128)}', space=vmem, size = 0x12000, scoped, tag = 'internal scratch']
  %s0 = inlined_call_operand.hbm [shape: f32[2,4,256], index: 0, kind: input, shape index: {}]
  %s1 = inlined_call_operand.hbm [shape: f32[2,4,256], index: 1, kind: output, shape index: {}]
  %s2 = sld [smem:[#allocation0]]
  $region41: #{tpu_custom_call.1} parent=0
    _
  %s4 = ssub.s32 1, %s2
  %s5 = scalar_select 0, %s4, %s2
  $region1: #{tpu_custom_call.1} parent=0
    #allocation2 [shape = 'u8[8192]{0}', space=vmem, size = 0x2000, scoped, tag = 'input window, operand 0']
    #allocation3 [shape = 's32[2]{0}', space=sflag, size = 0x8, scoped, tag = 'scoped memory for tpu_custom_call.1']
    #allocation4 [shape = 's32[2]{0}', space=sflag, size = 0x8, scoped, tag = 'scoped memory for tpu_custom_call.1']
    #allocation5 [shape = 'u8[8192]{0}', space=vmem, size = 0x2000, scoped, tag = 'output window, operand 0']
    %6 = vsyncpa [#allocation3], 0
    %s7 = scalar_lea.sflag [#allocation3], 1
    %8 = vsyncpa %s7, 0
    %9 = vsyncpa [#allocation4], 0
    %s10 = scalar_lea.sflag [#allocation4], 1
    %11 = vsyncpa %s10, 0
    loop: start=0, step=1, limit=4
    $region2: #{tpu_custom_call.1} parent=1 // loop_pre_header
      _
    $region3: #{tpu_custom_call.1} parent=1 // loop_header
      %s13 = sphi 0, %s17
      %p14 = scmp.ge.s32.totalorder %s13, 4
      %s20 = sphi 0, %s32
      %s21 = sphi 0, %s28
      %s22 = sphi 0, %s20
      %s23 = sphi 0, %s21
      %s24 = sphi 0, %s22
      %s25 = sphi 0, %s23
      %s37 = sphi 0, %s39
      %s40 = sphi 0, %s37
      %s41 = sphi 0, %s40
      %s57 = sphi 0, %s41
      %s65 = sphi 0, %s67
      %s68 = sphi 0, %s65
      %s69 = sphi 0, %s68
      %s85 = sphi 0, %s69
    $region4: #{tpu_custom_call.1} parent=1 // loop_header_branch
      %16 = sbr.rel (%p14) target = $region8
    $region5: #{tpu_custom_call.1} parent=1 // loop_body
      %s18 = ssub.s32 %s13, 1
      %s19 = ssub.s32 %s13, 2
      %s26 = sadd.s32 1, %s21
      %p27 = scmp.ge.s32.totalorder %s26, 1
      %s28 = scalar_select %p27, 0, %s26
      %s29 = sadd.s32 1, %s20
      %s30 = scalar_select %p27, %s29, %s20
      %p31 = scmp.ge.s32.totalorder %s30, 2
      %s32 = scalar_select %p31, 0, %s30
      %s33 = ssub.s32 %s20, %s32
      %s34 = ssub.s32 %s21, %s28
      %s35 = sor.u32 %s33, %s34
      %p36 = scmp.eq.s32.totalorder %s35, 0
      %s38 = sadd.s32 %s37, 1
      %s39 = scalar_select %p36, %s37, %s38
      %p42 = pneg %p36
      %p43 = scmp.eq.s32.totalorder %s13, 1
      %p44 = por %p42, %p43
      %p45 = scmp.ne.s32.totalorder %s37, %s40
      %p46 = scmp.eq.s32.totalorder %s13, 0
      %p47 = por %p45, %p46
      %p48 = scmp.ne.s32.totalorder %s37, %s40
      %p49 = scmp.eq.s32.totalorder %s18, 1
      %p50 = por %p48, %p49
      %p51 = scmp.ne.s32.totalorder %s40, %s41
      %p52 = scmp.eq.s32.totalorder %s18, 0
      %p53 = por %p51, %p52
      %p54 = scmp.ne.s32.totalorder %s40, %s41
      %p55 = scmp.eq.s32.totalorder %s19, 1
      %p56 = por %p54, %p55
      %p58 = scmp.ne.s32.totalorder %s41, %s57
      %p59 = scmp.eq.s32.totalorder %s19, 0
      %p60 = por %p58, %p59
      %s61 = ssub.s32 %s20, %s32
      %s62 = ssub.s32 %s21, %s28
      %s63 = sor.u32 %s61, %s62
      %p64 = scmp.eq.s32.totalorder %s63, 0
      %s66 = sadd.s32 %s65, 1
      %s67 = scalar_select %p64, %s65, %s66
      %p70 = pneg %p64
      %p71 = scmp.eq.s32.totalorder %s13, 1
      %p72 = por %p70, %p71
      %p73 = scmp.ne.s32.totalorder %s65, %s68
      %p74 = scmp.eq.s32.totalorder %s13, 0
      %p75 = por %p73, %p74
      %p76 = scmp.ne.s32.totalorder %s65, %s68
      %p77 = scmp.eq.s32.totalorder %s18, 1
      %p78 = por %p76, %p77
      %p79 = scmp.ne.s32.totalorder %s68, %s69
      %p80 = scmp.eq.s32.totalorder %s18, 0
      %p81 = por %p79, %p80
      %p82 = scmp.ne.s32.totalorder %s68, %s69
      %p83 = scmp.eq.s32.totalorder %s19, 1
      %p84 = por %p82, %p83
      %p86 = scmp.ne.s32.totalorder %s69, %s85
      %p87 = scmp.eq.s32.totalorder %s19, 0
      %p88 = por %p86, %p87
      %p89 = scmp.le.s32.totalorder 1, %s13
      %p90 = scmp.lt.s32.totalorder %s13, 3
      %p91 = pnand %p89, %p90
      %p92 = pneg %p91
      // Predicated region
      $region9: #{tpu_custom_call.1} parent=5 // pred_check
        _
      $region10: #{tpu_custom_call.1} parent=5 // pred_check_branch
        %94 = sbr.rel (%p91) target = $region12
      $region11: #{tpu_custom_call.1} parent=5 // pred_region
        %s95 = ssub.s32 %s13, 1
      $region12: #{tpu_custom_call.1} parent=5 // pred_fallthru
        _
      %p96 = scmp.lt.s32.totalorder %s13, 2
      // Predicated region
      $region13: #{tpu_custom_call.1} parent=5 // pred_check
        %p97 = pneg %p96
      $region14: #{tpu_custom_call.1} parent=5 // pred_check_branch
        %99 = sbr.rel (%p97) target = $region16
      $region15: #{tpu_custom_call.1} parent=5 // pred_region
        // Predicated region
        $region17: #{tpu_custom_call.1} parent=15 // pred_check
          %p100 = pneg %p47
        $region18: #{tpu_custom_call.1} parent=15 // pred_check_branch
          %102 = sbr.rel (%p100) target = $region20
        $region19: #{tpu_custom_call.1} parent=15 // pred_region
          %s103 = sand.u32 %s37, 1
          %s104 = scalar_lea.sflag [#allocation3], %s103
          %s105 = sand.u32 %s37, 1
          %s106 = smul.addr %s105, 8
          %s107 = scalar_lea.vmem [#allocation2], %s106
          %s108 = smul.u32 2, %s21
          %s110 = ssub.s32 128, 128
          %111 = vsyncadd %s104, %s110
          %s112 = smul.addr %s20, 2
          %s113 = sadd.s32 %s108, %s112
          %s114 = smul.addr %s113, 64
          %s115 = scalar_lea.hbm %s0, %s114
          %s117 = sshll.u32 %s107, 4
          %s118 = int_to_ptr.vmem [resolvable:$true] %s117
          %120 = dma.hbm_to_vmem [thread:$0]  %s115, 128, %s118, %s104
        $region20: #{tpu_custom_call.1} parent=15 // pred_fallthru
          _
      $region16: #{tpu_custom_call.1} parent=5 // pred_fallthru
        _
      %p121 = scmp.le.s32.totalorder 1, %s13
      %p122 = scmp.lt.s32.totalorder %s13, 3
      %p123 = pnand %p121, %p122
      %p124 = pneg %p123
      // Predicated region
      $region21: #{tpu_custom_call.1} parent=5 // pred_check
        _
      $region22: #{tpu_custom_call.1} parent=5 // pred_check_branch
        %126 = sbr.rel (%p123) target = $region24
      $region23: #{tpu_custom_call.1} parent=5 // pred_region
        %s127 = ssub.s32 %s13, 1
        %s128 = sand.u32 %s40, 1
        %s129 = scalar_lea.sflag [#allocation3], %s128
        %s130 = sand.u32 %s40, 1
        %s131 = smul.addr %s130, 8
        %s132 = scalar_lea.vmem [#allocation2], %s131
        // Predicated region
        $region25: #{tpu_custom_call.1} parent=23 // pred_check
          %p133 = pneg %p53
        $region26: #{tpu_custom_call.1} parent=23 // pred_check_branch
          %135 = sbr.rel (%p133) target = $region28
        $region27: #{tpu_custom_call.1} parent=23 // pred_region
          %136 = dma.done %s129, 128
        $region28: #{tpu_custom_call.1} parent=23 // pred_fallthru
          _
        %s137 = sand.u32 %s40, 1
        %s138 = scalar_lea.sflag [#allocation3], %s137
        %s139 = sand.u32 %s40, 1
        %s140 = smul.addr %s139, 8
        %s141 = scalar_lea.vmem [#allocation2], %s140
        %p142 = pneg %p53
        %p143 = pneg %p50
        %p144 = pneg %p81
        %p145 = pneg %p78
        %s146 = sand.u32 %s68, 1
        %s147 = scalar_lea.sflag [#allocation4], %s146
        %s148 = sand.u32 %s68, 1
        %s149 = smul.addr %s148, 8
        %s150 = scalar_lea.vmem [#allocation5], %s149
        %s151 = smul.u32 2, %s23
        %s152 = smul.u32 2, %s23
        %v153 = vld [vmem:[%s132] sm:$0xff]
        %v154 = vmul.f32 %v153, %v153
        %v156 = vcombine.high %v154, %v154
        %vm158 = vcmask 1043456
        %v159 = vsel %vm158, %v154, 0.0
        %v160 = vrot.slane %v159, 4
        %v161 = vadd.f32 %v159, %v160
        %v162 = vrot.slane %v161, 2
        %v163 = vadd.f32 %v161, %v162
        %v164 = vrot.slane %v163, 1
        %v165 = vadd.f32 %v163, %v164
        %v166 = vsel %vm158, %v156, 0.0
        %v167 = vrot.slane %v166, 4
        %v168 = vadd.f32 %v166, %v167
        %v169 = vrot.slane %v168, 2
        %v170 = vadd.f32 %v168, %v169
        %v171 = vrot.slane %v170, 1
        %v172 = vadd.f32 %v170, %v171
        %v173 = vmul.f32 %v165, 0.25
        %v174 = vmul.f32 %v172, 0.25
        %v175 = vadd.f32 %v173, 1e-08
        %v176 = vadd.f32 %v174, 1e-08
        %v177 = vrsqrt.pop %v175
        %v178 = vrsqrt.pop %v176
        %v181 = vcombine.low %v177, %v178
        %v183 = vmul.f32 %v153, %v181
        %184 = vst [vmem:[%s150] sm:$0xff] %v183
        %s185 = sand.u32 %s68, 1
        %s186 = scalar_lea.sflag [#allocation4], %s185
        %s187 = sand.u32 %s68, 1
        %s188 = smul.addr %s187, 8
        %s189 = scalar_lea.vmem [#allocation5], %s188
        // Predicated region
        $region29: #{tpu_custom_call.1} parent=23 // pred_check
          %p190 = pneg %p78
        $region30: #{tpu_custom_call.1} parent=23 // pred_check_branch
          %192 = sbr.rel (%p190) target = $region32
        $region31: #{tpu_custom_call.1} parent=23 // pred_region
          %s193 = smul.u32 2, %s23
          %s195 = ssub.s32 128, 128
          %196 = vsyncadd %s186, %s195
          %s197 = smul.addr %s22, 2
          %s198 = sadd.s32 %s193, %s197
          %s199 = smul.addr %s198, 64
          %s200 = scalar_lea.hbm %s1, %s199
          %s202 = sshll.u32 %s189, 4
          %s203 = int_to_ptr.vmem [resolvable:$true] %s202
          %205 = dma.vmem_to_hbm [thread:$0]  %s203, 128, %s200, %s186
        $region32: #{tpu_custom_call.1} parent=23 // pred_fallthru
          _
      $region24: #{tpu_custom_call.1} parent=5 // pred_fallthru
        _
      %p206 = scmp.le.s32.totalorder 2, %s13
      // Predicated region
      $region33: #{tpu_custom_call.1} parent=5 // pred_check
        %p207 = pneg %p206
      $region34: #{tpu_custom_call.1} parent=5 // pred_check_branch
        %209 = sbr.rel (%p207) target = $region36
      $region35: #{tpu_custom_call.1} parent=5 // pred_region
        %s210 = ssub.s32 %s13, 2
        // Predicated region
        $region37: #{tpu_custom_call.1} parent=35 // pred_check
          %p211 = pneg %p84
        $region38: #{tpu_custom_call.1} parent=35 // pred_check_branch
          %213 = sbr.rel (%p211) target = $region40
        $region39: #{tpu_custom_call.1} parent=35 // pred_region
          %s214 = sand.u32 %s69, 1
          %s215 = scalar_lea.sflag [#allocation4], %s214
          %s216 = sand.u32 %s69, 1
          %s217 = smul.addr %s216, 8
          %s218 = scalar_lea.vmem [#allocation5], %s217
          %219 = dma.done %s215, 128
        $region40: #{tpu_custom_call.1} parent=35 // pred_fallthru
          _
      $region36: #{tpu_custom_call.1} parent=5 // pred_fallthru
        _
    $region6: #{tpu_custom_call.1} parent=1 // loop_footer
      %s17 = sadd.s32 1, %s13
    $region7: #{tpu_custom_call.1} parent=1 // loop_footer_branch
      %12 = sbr.rel target = $region3
    $region8: #{tpu_custom_call.1} parent=1 // loop_exit
      _
    %220 = vsyncpa [#allocation3], 1
    %s221 = scalar_lea.sflag [#allocation3], 1
    %222 = vsyncpa %s221, 1
    %223 = vsyncpa [#allocation4], 1
    %s224 = scalar_lea.sflag [#allocation4], 1
    %225 = vsyncpa %s224, 1

</llo_original>
